<compile_context>
chip_gen: v7x
topology: tpu7x:2x2x1
jax: 0.10.0
libtpu: 0.0.40
codegen_flags: <defaults>
</compile_context>

<pallas_src>
import functools

import jax
import jax.numpy as jnp
from jax.experimental import pallas as pl
from jax.experimental.pallas import tpu as pltpu


def _round_up(x, m):
    return ((x + m - 1) // m) * m


def _detect_vmem_capacity_bytes():
    """Physical per-core VMEM in bytes (v7x: 64 MiB/TC, v5e/v6e: 128 MiB)."""
    try:
        info = pltpu.get_tpu_info()
        for attr in ("vmem_capacity_bytes", "vmem_size_bytes", "vmem_bytes"):
            val = getattr(info, attr, None)
            if val:
                return int(val)
    except Exception:
        pass
    try:
        kind = jax.devices()[0].device_kind.lower()
    except Exception:
        kind = ""
    if "v7" in kind:
        return 64 << 20
    if "v5" in kind or "v6" in kind:
        return 128 << 20
    return 64 << 20  # conservative default when detection fails


def _choose_tile_b(b8, cap, budget, tile_vmem):
    """Batch tile: multiple of 8, fits `budget` VMEM, avoids padded rows when
    possible, and keeps >= 2 grid steps when there is enough work (so the
    'parallel' batch axis can shard over both v7x TensorCores)."""
    tile_b = max(8, min(_round_up(cap, 8), b8))
    while tile_b > 8 and tile_vmem(tile_b) > budget:
        tile_b = max(8, _round_up(tile_b // 2, 8))
    if tile_b >= b8 and b8 >= 16:
        tile_b = _round_up((b8 + 1) // 2, 8)
    # Prefer an exact divisor of the (8-padded) batch so no padded rows are
    # streamed / computed, as long as the tile stays reasonably large.
    t = tile_b
    while t > 8 and b8 % t != 0:
        t -= 8
    if t >= max(8, tile_b // 4):
        tile_b = t
    return tile_b


def vae_forward_kernel(
    x_ref,
    w1_ref, b1_ref,
    w2_ref, b2_ref,
    w3_ref, b3_ref,        # fused & 128-lane-padded [w31 | w32], [b31 | b32]
    w4_ref, b4_ref,
    w5_ref, b5_ref,
    w6_ref, b6_ref,        # output columns padded to X_PAD
    eps_ref,
    recon_ref, mulv_ref, z_ref,
    *, z_pad,
):
    f32 = jnp.float32
    bf16 = jnp.bfloat16

    x = x_ref[...]                      # streamed as bf16

    # ----- encoder (bf16 MXU operands, f32 accumulation, f32 elementwise) -----
    h = jnp.dot(x, w1_ref[...], preferred_element_type=f32) + b1_ref[...]
    h = jnp.maximum(h, 0.0)
    h = jnp.dot(h.astype(bf16), w2_ref[...], preferred_element_type=f32) + b2_ref[...]
    h = jnp.maximum(h, 0.0)

    # Fused mu / log_var projection; each half is a full 128-lane-aligned block,
    # so the split below is a free vreg slice (no XLU lane rotates).
    mu_lv = jnp.dot(h.astype(bf16), w3_ref[...], preferred_element_type=f32) + b3_ref[...]
    mu = mu_lv[:, :z_pad]
    log_var = mu_lv[:, z_pad:]

    # ----- sampling (reparameterization trick), f32 -----
    std = jnp.exp(0.5 * log_var)
    z = eps_ref[...] * std + mu         # pad lanes: eps=0, mu=0 -> z=0

    # ----- decoder -----
    d = jnp.dot(z.astype(bf16), w4_ref[...], preferred_element_type=f32) + b4_ref[...]
    d = jnp.maximum(d, 0.0)
    d = jnp.dot(d.astype(bf16), w5_ref[...], preferred_element_type=f32) + b5_ref[...]
    d = jnp.maximum(d, 0.0)
    logits = jnp.dot(d.astype(bf16), w6_ref[...], preferred_element_type=f32) + b6_ref[...]

    # Exact sigmoid: exp runs on the EUP, reciprocal is exact (recon may feed a
    # training loss; approx reciprocal is reserved for inference builds).
    recon = 1.0 / (1.0 + jnp.exp(-logits))

    # All output tiles are lane-dense (widths are multiples of 128): unmasked vst.
    recon_ref[...] = recon.astype(recon_ref.dtype)
    mulv_ref[...] = mu_lv.astype(mulv_ref.dtype)
    z_ref[...] = z.astype(z_ref.dtype)


def vae_forward(x, params, eps, *, tile_b=1024, out_dtype=jnp.float32):
    """x: any shape flattenable to (-1, x_dim). Returns (recon, mu, log_var, z).

    Set out_dtype=jnp.bfloat16 to halve recon writeback bytes (inference)."""
    x_dim = params["w1"].shape[0]
    h_dim1 = params["w1"].shape[1]
    h_dim2 = params["w2"].shape[1]
    z_dim = params["w31"].shape[1]

    z_pad = _round_up(z_dim, 128)       # mu / log_var / z lane-padded width
    x_pad = _round_up(x_dim, 128)       # recon lane-padded width

    # x only ever feeds the MXU -> stream it as bf16 (halves input DMA bytes
    # and the double-buffered x tile). eps stays f32 (tiny, feeds f32 math).
    xf = x.reshape(-1, x_dim).astype(jnp.bfloat16)
    B = xf.shape[0]
    eps = eps.reshape(B, z_dim).astype(jnp.float32)

    def pad_cols(a, n):
        return jnp.pad(a, ((0, 0), (0, n - a.shape[1])))

    def pad_rows(a, n):
        return jnp.pad(a, ((0, n - a.shape[0]), (0, 0)))

    # Fuse mu / log_var projections; pad each half to a 128-lane block so the
    # in-kernel split, z, and decoder path are all lane-aligned. Pad columns /
    # rows are zero, so padded lanes carry exact zeros (log_var pad = 0 ->
    # std pad = 1, eps pad = 0, mu pad = 0 -> z pad = 0 -> no decoder effect).
    w3 = jnp.concatenate(
        [pad_cols(params["w31"], z_pad), pad_cols(params["w32"], z_pad)], axis=1)
    b3 = jnp.concatenate(
        [pad_cols(params["b31"], z_pad), pad_cols(params["b32"], z_pad)], axis=1)
    w4 = pad_rows(params["w4"], z_pad)
    w6 = pad_cols(params["w6"], x_pad)
    b6 = pad_cols(params["b6"], x_pad)

    wc = lambda w: w.astype(jnp.bfloat16)   # MXU operands
    bc = lambda b: b.astype(jnp.float32)    # biases stay on the f32 accum path
    weights = (
        wc(params["w1"]), bc(params["b1"]),
        wc(params["w2"]), bc(params["b2"]),
        wc(w3), bc(b3),
        wc(w4), bc(params["b4"]),
        wc(params["w5"]), bc(params["b5"]),
        wc(w6), bc(b6),
    )
    weight_bytes = sum(int(w.size) * w.dtype.itemsize for w in weights)

    out_itemsize = jnp.dtype(out_dtype).itemsize

    def tile_vmem(tb):
        # Double-buffered streamed tiles. Weights are charged 2x as well: they
        # use a constant index_map; pl.Buffered(1) pipeline_mode could drop the
        # second buffer, but is left at the default for lowering portability.
        io = 2 * tb * (x_dim * 2 + z_pad * 4
                       + x_pad * out_itemsize + 2 * z_pad * 4 + z_pad * 4)
        # Live f32 activations (rough upper bound).
        act = 4 * tb * (x_dim + 2 * h_dim1 + 2 * h_dim2 + 4 * z_pad + 2 * x_pad)
        return 2 * weight_bytes + io + act

    vmem_cap = _detect_vmem_capacity_bytes()
    budget = int(vmem_cap * 0.55)

    b8 = _round_up(B, 8)
    tile_b = _choose_tile_b(b8, tile_b, budget, tile_vmem)
    Bp = _round_up(B, tile_b)

    if Bp != B or z_pad != z_dim:
        xf = jnp.pad(xf, ((0, Bp - B), (0, 0)))
        eps = jnp.pad(eps, ((0, Bp - B), (0, z_pad - z_dim)))
    grid = (Bp // tile_b,)

    batch_map = lambda i: (i, 0)
    const_map = lambda i: (0, 0)

    in_specs = [pl.BlockSpec((tile_b, x_dim), batch_map)]
    in_specs += [pl.BlockSpec(w.shape, const_map) for w in weights]
    in_specs += [pl.BlockSpec((tile_b, z_pad), batch_map)]

    out_specs = [
        pl.BlockSpec((tile_b, x_pad), batch_map),
        pl.BlockSpec((tile_b, 2 * z_pad), batch_map),
        pl.BlockSpec((tile_b, z_pad), batch_map),
    ]
    out_shape = (
        jax.ShapeDtypeStruct((Bp, x_pad), out_dtype),          # recon (lane-padded)
        jax.ShapeDtypeStruct((Bp, 2 * z_pad), jnp.float32),    # [mu | log_var]
        jax.ShapeDtypeStruct((Bp, z_pad), jnp.float32),        # z
    )

    flops = 2 * Bp * (
        x_dim * h_dim1 + h_dim1 * h_dim2 + h_dim2 * 2 * z_pad
        + z_pad * h_dim2 + h_dim2 * h_dim1 + h_dim1 * x_pad
    )
    cost = pl.CostEstimate(
        flops=flops,
        transcendentals=Bp * (z_pad + x_pad),
        bytes_accessed=int(
            Bp * x_dim * 2 + Bp * z_pad * 4 + weight_bytes
            + Bp * x_pad * out_itemsize + Bp * 3 * z_pad * 4),
    )

    # Explicit scoped-VMEM limit: defaults are 16 MiB (v5e) / 32 MiB (v6e/v7x),
    # which is either too small for the chosen tile or leaves v6e VMEM idle.
    vmem_limit = min(vmem_cap, max(32 << 20, int(tile_vmem(tile_b) * 1.5) + (4 << 20)))

    kernel = functools.partial(vae_forward_kernel, z_pad=z_pad)
    recon_p, mulv, z_p = pl.pallas_call(
        kernel,
        out_shape=out_shape,
        grid_spec=pltpu.PrefetchScalarGridSpec(
            num_scalar_prefetch=0,
            grid=grid,
            in_specs=in_specs,
            out_specs=out_specs,
        ),
        compiler_params=pltpu.CompilerParams(
            dimension_semantics=("parallel",),
            vmem_limit_bytes=int(vmem_limit),
        ),
        cost_estimate=cost,
    )(xf, *weights, eps)

    recon = recon_p[:B, :x_dim]
    mu = mulv[:B, :z_dim]
    log_var = mulv[:B, z_pad:z_pad + z_dim]
    z = z_p[:B, :z_dim]
    return recon, mu, log_var, z


def init_params(key, x_dim, h_dim1, h_dim2, z_dim):
    """PyTorch-Linear-style init (uniform +/- 1/sqrt(fan_in)).
    Weights stored transposed: (in_features, out_features)."""
    def linear(k, fan_in, fan_out):
        kw, kb = jax.random.split(k)
        bound = 1.0 / jnp.sqrt(fan_in)
        w = jax.random.uniform(kw, (fan_in, fan_out), jnp.float32, -bound, bound)
        b = jax.random.uniform(kb, (1, fan_out), jnp.float32, -bound, bound)
        return w, b

    keys = jax.random.split(key, 7)
    p = {}
    p["w1"], p["b1"] = linear(keys[0], x_dim, h_dim1)
    p["w2"], p["b2"] = linear(keys[1], h_dim1, h_dim2)
    p["w31"], p["b31"] = linear(keys[2], h_dim2, z_dim)
    p["w32"], p["b32"] = linear(keys[3], h_dim2, z_dim)
    p["w4"], p["b4"] = linear(keys[4], z_dim, h_dim2)
    p["w5"], p["b5"] = linear(keys[5], h_dim2, h_dim1)
    p["w6"], p["b6"] = linear(keys[6], h_dim1, x_dim)
    return p


if __name__ == "__main__":
    # Module hyperparameters (small).
    x_dim, h_dim1, h_dim2, z_dim = 64, 32, 32, 16

    key = jax.random.PRNGKey(0)
    k_x, k_p, k_eps = jax.random.split(key, 3)

    # Input shaped like a small image batch; forward does x.view(-1, x_dim).
    x = jax.random.normal(k_x, (8, 4, 16), dtype=jnp.float32)  # 8*4*16 / 64 -> B=8
    B = x.size // x_dim

    params = init_params(k_p, x_dim, h_dim1, h_dim2, z_dim)

    # eps ~ randn_like(std): generated host-side for determinism, fed to the kernel.
    # TODO(synk): torch.randn_like is drawn inside sampling(); here the noise is
    # supplied as an explicit input instead of in-kernel RNG.
    eps = jax.random.normal(k_eps, (B, z_dim), dtype=jnp.float32)

    recon, mu, log_var, z = vae_forward(x, params, eps)
    jax.block_until_ready((recon, mu, log_var, z))

    # Sanity: full-f32 reference in plain JAX (kernel uses bf16 matmul operands,
    # so compare with a loosened tolerance).
    xf = x.reshape(-1, x_dim)
    h = jnp.maximum(xf @ params["w1"] + params["b1"], 0.0)
    h = jnp.maximum(h @ params["w2"] + params["b2"], 0.0)
    mu_ref = h @ params["w31"] + params["b31"]
    lv_ref = h @ params["w32"] + params["b32"]
    z_ref = eps * jnp.exp(0.5 * lv_ref) + mu_ref
    d = jnp.maximum(z_ref @ params["w4"] + params["b4"], 0.0)
    d = jnp.maximum(d @ params["w5"] + params["b5"], 0.0)
    recon_ref = jax.nn.sigmoid(d @ params["w6"] + params["b6"])

    tol = 3e-2
    assert recon.shape == recon_ref.shape and mu.shape == mu_ref.shape
    assert jnp.allclose(recon, recon_ref, atol=tol), jnp.max(jnp.abs(recon - recon_ref))
    assert jnp.allclose(mu, mu_ref, atol=tol), jnp.max(jnp.abs(mu - mu_ref))
    assert jnp.allclose(log_var, lv_ref, atol=tol), jnp.max(jnp.abs(log_var - lv_ref))
    assert jnp.allclose(z, z_ref, atol=tol), jnp.max(jnp.abs(z - z_ref))

    print("KERNEL_OK")
</pallas_src>

<mosaic_0001>
module attributes {stable_mosaic.version = 11 : i64} {
  func.func @vae_forward_kernel(%arg0: i32, %arg1: memref<8x64xbf16, #tpu.memory_space<vmem>>, %arg2: memref<64x32xbf16, #tpu.memory_space<vmem>>, %arg3: memref<1x32xf32, #tpu.memory_space<vmem>>, %arg4: memref<32x32xbf16, #tpu.memory_space<vmem>>, %arg5: memref<1x32xf32, #tpu.memory_space<vmem>>, %arg6: memref<32x256xbf16, #tpu.memory_space<vmem>>, %arg7: memref<1x256xf32, #tpu.memory_space<vmem>>, %arg8: memref<128x32xbf16, #tpu.memory_space<vmem>>, %arg9: memref<1x32xf32, #tpu.memory_space<vmem>>, %arg10: memref<32x32xbf16, #tpu.memory_space<vmem>>, %arg11: memref<1x32xf32, #tpu.memory_space<vmem>>, %arg12: memref<32x128xbf16, #tpu.memory_space<vmem>>, %arg13: memref<1x128xf32, #tpu.memory_space<vmem>>, %arg14: memref<8x128xf32, #tpu.memory_space<vmem>>, %arg15: memref<8x128xf32, #tpu.memory_space<vmem>>, %arg16: memref<8x256xf32, #tpu.memory_space<vmem>>, %arg17: memref<8x128xf32, #tpu.memory_space<vmem>>) attributes {dimension_semantics = [#tpu.dimension_semantics<parallel>], iteration_bounds = array<i64: 1>, scalar_prefetch = 0 : i64, scratch_operands = 0 : i64, tpu.core_type = #tpu.core_type<tc>, window_params = [{transform_indices = @transform_0, window_bounds = array<i64: 8, 64>}, {pipeline_mode = #tpu.pipeline_mode<synchronous>, transform_indices = @transform_1, window_bounds = array<i64: 64, 32>}, {pipeline_mode = #tpu.pipeline_mode<synchronous>, transform_indices = @transform_2, window_bounds = array<i64: 1, 32>}, {pipeline_mode = #tpu.pipeline_mode<synchronous>, transform_indices = @transform_3, window_bounds = array<i64: 32, 32>}, {pipeline_mode = #tpu.pipeline_mode<synchronous>, transform_indices = @transform_4, window_bounds = array<i64: 1, 32>}, {pipeline_mode = #tpu.pipeline_mode<synchronous>, transform_indices = @transform_5, window_bounds = array<i64: 32, 256>}, {pipeline_mode = #tpu.pipeline_mode<synchronous>, transform_indices = @transform_6, window_bounds = array<i64: 1, 256>}, {pipeline_mode = #tpu.pipeline_mode<synchronous>, transform_indices = @transform_7, window_bounds = array<i64: 128, 32>}, {pipeline_mode = #tpu.pipeline_mode<synchronous>, transform_indices = @transform_8, window_bounds = array<i64: 1, 32>}, {pipeline_mode = #tpu.pipeline_mode<synchronous>, transform_indices = @transform_9, window_bounds = array<i64: 32, 32>}, {pipeline_mode = #tpu.pipeline_mode<synchronous>, transform_indices = @transform_10, window_bounds = array<i64: 1, 32>}, {pipeline_mode = #tpu.pipeline_mode<synchronous>, transform_indices = @transform_11, window_bounds = array<i64: 32, 128>}, {pipeline_mode = #tpu.pipeline_mode<synchronous>, transform_indices = @transform_12, window_bounds = array<i64: 1, 128>}, {transform_indices = @transform_13, window_bounds = array<i64: 8, 128>}, {transform_indices = @transform_14, window_bounds = array<i64: 8, 128>}, {transform_indices = @transform_15, window_bounds = array<i64: 8, 256>}, {transform_indices = @transform_16, window_bounds = array<i64: 8, 128>}]} {
    %c0 = arith.constant 0 : index
    %c0_0 = arith.constant 0 : index
    %0 = vector.load %arg1[%c0, %c0_0] : memref<8x64xbf16, #tpu.memory_space<vmem>>, vector<8x64xbf16>
    %c0_1 = arith.constant 0 : index
    %c0_2 = arith.constant 0 : index
    %1 = vector.load %arg2[%c0_1, %c0_2] : memref<64x32xbf16, #tpu.memory_space<vmem>>, vector<64x32xbf16>
    %cst = arith.constant dense<0.000000e+00> : vector<8x32xf32>
    %2 = tpu.matmul %0, %1, %cst {dimension_numbers = #tpu.dot_dimension_numbers<[1], [0], [0], [1], [0, 0, 1, 1], [], []>} : vector<8x64xbf16>, vector<64x32xbf16>, vector<8x32xf32> -> vector<8x32xf32>
    %c0_3 = arith.constant 0 : index
    %c0_4 = arith.constant 0 : index
    %3 = vector.load %arg3[%c0_3, %c0_4] : memref<1x32xf32, #tpu.memory_space<vmem>>, vector<1x32xf32>
    %4 = vector.broadcast %3 : vector<1x32xf32> to vector<8x32xf32>
    %5 = arith.addf %2, %4 : vector<8x32xf32>
    %cst_5 = arith.constant 0.000000e+00 : f32
    %6 = vector.broadcast %cst_5 : f32 to vector<8x32xf32>
    %7 = arith.maximumf %5, %6 : vector<8x32xf32>
    %8 = arith.truncf %7 : vector<8x32xf32> to vector<8x32xbf16>
    %c0_6 = arith.constant 0 : index
    %c0_7 = arith.constant 0 : index
    %9 = vector.load %arg4[%c0_6, %c0_7] : memref<32x32xbf16, #tpu.memory_space<vmem>>, vector<32x32xbf16>
    %cst_8 = arith.constant dense<0.000000e+00> : vector<8x32xf32>
    %10 = tpu.matmul %8, %9, %cst_8 {dimension_numbers = #tpu.dot_dimension_numbers<[1], [0], [0], [1], [0, 0, 1, 1], [], []>} : vector<8x32xbf16>, vector<32x32xbf16>, vector<8x32xf32> -> vector<8x32xf32>
    %c0_9 = arith.constant 0 : index
    %c0_10 = arith.constant 0 : index
    %11 = vector.load %arg5[%c0_9, %c0_10] : memref<1x32xf32, #tpu.memory_space<vmem>>, vector<1x32xf32>
    %12 = vector.broadcast %11 : vector<1x32xf32> to vector<8x32xf32>
    %13 = arith.addf %10, %12 : vector<8x32xf32>
    %cst_11 = arith.constant 0.000000e+00 : f32
    %14 = vector.broadcast %cst_11 : f32 to vector<8x32xf32>
    %15 = arith.maximumf %13, %14 : vector<8x32xf32>
    %16 = arith.truncf %15 : vector<8x32xf32> to vector<8x32xbf16>
    %c0_12 = arith.constant 0 : index
    %c0_13 = arith.constant 0 : index
    %17 = vector.load %arg6[%c0_12, %c0_13] : memref<32x256xbf16, #tpu.memory_space<vmem>>, vector<32x256xbf16>
    %cst_14 = arith.constant dense<0.000000e+00> : vector<8x256xf32>
    %18 = tpu.matmul %16, %17, %cst_14 {dimension_numbers = #tpu.dot_dimension_numbers<[1], [0], [0], [1], [0, 0, 1, 1], [], []>} : vector<8x32xbf16>, vector<32x256xbf16>, vector<8x256xf32> -> vector<8x256xf32>
    %c0_15 = arith.constant 0 : index
    %c0_16 = arith.constant 0 : index
    %19 = vector.load %arg7[%c0_15, %c0_16] : memref<1x256xf32, #tpu.memory_space<vmem>>, vector<1x256xf32>
    %20 = vector.broadcast %19 : vector<1x256xf32> to vector<8x256xf32>
    %21 = arith.addf %18, %20 : vector<8x256xf32>
    %22 = vector.extract_strided_slice %21 {offsets = [0, 0], sizes = [8, 128], strides = [1, 1]} : vector<8x256xf32> to vector<8x128xf32>
    %23 = vector.extract_strided_slice %21 {offsets = [0, 128], sizes = [8, 128], strides = [1, 1]} : vector<8x256xf32> to vector<8x128xf32>
    %cst_17 = arith.constant 5.000000e-01 : f32
    %24 = vector.broadcast %cst_17 : f32 to vector<8x128xf32>
    %25 = arith.mulf %24, %23 : vector<8x128xf32>
    %26 = math.exp %25 : vector<8x128xf32>
    %c0_18 = arith.constant 0 : index
    %c0_19 = arith.constant 0 : index
    %27 = vector.load %arg14[%c0_18, %c0_19] : memref<8x128xf32, #tpu.memory_space<vmem>>, vector<8x128xf32>
    %28 = arith.mulf %27, %26 : vector<8x128xf32>
    %29 = arith.addf %28, %22 : vector<8x128xf32>
    %30 = arith.truncf %29 : vector<8x128xf32> to vector<8x128xbf16>
    %c0_20 = arith.constant 0 : index
    %c0_21 = arith.constant 0 : index
    %31 = vector.load %arg8[%c0_20, %c0_21] : memref<128x32xbf16, #tpu.memory_space<vmem>>, vector<128x32xbf16>
    %cst_22 = arith.constant dense<0.000000e+00> : vector<8x32xf32>
    %32 = tpu.matmul %30, %31, %cst_22 {dimension_numbers = #tpu.dot_dimension_numbers<[1], [0], [0], [1], [0, 0, 1, 1], [], []>} : vector<8x128xbf16>, vector<128x32xbf16>, vector<8x32xf32> -> vector<8x32xf32>
    %c0_23 = arith.constant 0 : index
    %c0_24 = arith.constant 0 : index
    %33 = vector.load %arg9[%c0_23, %c0_24] : memref<1x32xf32, #tpu.memory_space<vmem>>, vector<1x32xf32>
    %34 = vector.broadcast %33 : vector<1x32xf32> to vector<8x32xf32>
    %35 = arith.addf %32, %34 : vector<8x32xf32>
    %cst_25 = arith.constant 0.000000e+00 : f32
    %36 = vector.broadcast %cst_25 : f32 to vector<8x32xf32>
    %37 = arith.maximumf %35, %36 : vector<8x32xf32>
    %38 = arith.truncf %37 : vector<8x32xf32> to vector<8x32xbf16>
    %c0_26 = arith.constant 0 : index
    %c0_27 = arith.constant 0 : index
    %39 = vector.load %arg10[%c0_26, %c0_27] : memref<32x32xbf16, #tpu.memory_space<vmem>>, vector<32x32xbf16>
    %cst_28 = arith.constant dense<0.000000e+00> : vector<8x32xf32>
    %40 = tpu.matmul %38, %39, %cst_28 {dimension_numbers = #tpu.dot_dimension_numbers<[1], [0], [0], [1], [0, 0, 1, 1], [], []>} : vector<8x32xbf16>, vector<32x32xbf16>, vector<8x32xf32> -> vector<8x32xf32>
    %c0_29 = arith.constant 0 : index
    %c0_30 = arith.constant 0 : index
    %41 = vector.load %arg11[%c0_29, %c0_30] : memref<1x32xf32, #tpu.memory_space<vmem>>, vector<1x32xf32>
    %42 = vector.broadcast %41 : vector<1x32xf32> to vector<8x32xf32>
    %43 = arith.addf %40, %42 : vector<8x32xf32>
    %cst_31 = arith.constant 0.000000e+00 : f32
    %44 = vector.broadcast %cst_31 : f32 to vector<8x32xf32>
    %45 = arith.maximumf %43, %44 : vector<8x32xf32>
    %46 = arith.truncf %45 : vector<8x32xf32> to vector<8x32xbf16>
    %c0_32 = arith.constant 0 : index
    %c0_33 = arith.constant 0 : index
    %47 = vector.load %arg12[%c0_32, %c0_33] : memref<32x128xbf16, #tpu.memory_space<vmem>>, vector<32x128xbf16>
    %cst_34 = arith.constant dense<0.000000e+00> : vector<8x128xf32>
    %48 = tpu.matmul %46, %47, %cst_34 {dimension_numbers = #tpu.dot_dimension_numbers<[1], [0], [0], [1], [0, 0, 1, 1], [], []>} : vector<8x32xbf16>, vector<32x128xbf16>, vector<8x128xf32> -> vector<8x128xf32>
    %c0_35 = arith.constant 0 : index
    %c0_36 = arith.constant 0 : index
    %49 = vector.load %arg13[%c0_35, %c0_36] : memref<1x128xf32, #tpu.memory_space<vmem>>, vector<1x128xf32>
    %50 = vector.broadcast %49 : vector<1x128xf32> to vector<8x128xf32>
    %51 = arith.addf %48, %50 : vector<8x128xf32>
    %cst_37 = arith.constant 0.000000e+00 : f32
    %52 = vector.broadcast %cst_37 : f32 to vector<8x128xf32>
    %53 = arith.subf %52, %51 : vector<8x128xf32>
    %54 = math.exp %53 : vector<8x128xf32>
    %cst_38 = arith.constant 1.000000e+00 : f32
    %55 = vector.broadcast %cst_38 : f32 to vector<8x128xf32>
    %56 = arith.addf %55, %54 : vector<8x128xf32>
    %cst_39 = arith.constant 1.000000e+00 : f32
    %57 = vector.broadcast %cst_39 : f32 to vector<8x128xf32>
    %58 = arith.divf %57, %56 : vector<8x128xf32>
    %c0_40 = arith.constant 0 : index
    %c0_41 = arith.constant 0 : index
    %59 = vector.load %arg15[%c0_40, %c0_41] : memref<8x128xf32, #tpu.memory_space<vmem>>, vector<8x128xf32>
    tpu.vector_store %arg15[%c0_40, %c0_41], %58 {strides = array<i32>} : memref<8x128xf32, #tpu.memory_space<vmem>>, vector<8x128xf32>,
    %c0_42 = arith.constant 0 : index
    %c0_43 = arith.constant 0 : index
    %60 = vector.load %arg16[%c0_42, %c0_43] : memref<8x256xf32, #tpu.memory_space<vmem>>, vector<8x256xf32>
    tpu.vector_store %arg16[%c0_42, %c0_43], %21 {strides = array<i32>} : memref<8x256xf32, #tpu.memory_space<vmem>>, vector<8x256xf32>,
    %c0_44 = arith.constant 0 : index
    %c0_45 = arith.constant 0 : index
    %61 = vector.load %arg17[%c0_44, %c0_45] : memref<8x128xf32, #tpu.memory_space<vmem>>, vector<8x128xf32>
    tpu.vector_store %arg17[%c0_44, %c0_45], %29 {strides = array<i32>} : memref<8x128xf32, #tpu.memory_space<vmem>>, vector<8x128xf32>,
    return
  }
  func.func @transform_0(%arg0: i32) -> (i32, i32) {
    %c0_i32 = arith.constant 0 : i32
    %c0_i32_0 = arith.constant 0 : i32
    return %arg0, %c0_i32 : i32, i32
  }
  func.func @transform_1(%arg0: i32) -> (i32, i32) {
    %c0_i32 = arith.constant 0 : i32
    %c0_i32_0 = arith.constant 0 : i32
    %c0_i32_1 = arith.constant 0 : i32
    return %c0_i32, %c0_i32_0 : i32, i32
  }
  func.func @transform_2(%arg0: i32) -> (i32, i32) {
    %c0_i32 = arith.constant 0 : i32
    %c0_i32_0 = arith.constant 0 : i32
    %c0_i32_1 = arith.constant 0 : i32
    return %c0_i32, %c0_i32_0 : i32, i32
  }
  func.func @transform_3(%arg0: i32) -> (i32, i32) {
    %c0_i32 = arith.constant 0 : i32
    %c0_i32_0 = arith.constant 0 : i32
    %c0_i32_1 = arith.constant 0 : i32
    return %c0_i32, %c0_i32_0 : i32, i32
  }
  func.func @transform_4(%arg0: i32) -> (i32, i32) {
    %c0_i32 = arith.constant 0 : i32
    %c0_i32_0 = arith.constant 0 : i32
    %c0_i32_1 = arith.constant 0 : i32
    return %c0_i32, %c0_i32_0 : i32, i32
  }
  func.func @transform_5(%arg0: i32) -> (i32, i32) {
    %c0_i32 = arith.constant 0 : i32
    %c0_i32_0 = arith.constant 0 : i32
    %c0_i32_1 = arith.constant 0 : i32
    return %c0_i32, %c0_i32_0 : i32, i32
  }
  func.func @transform_6(%arg0: i32) -> (i32, i32) {
    %c0_i32 = arith.constant 0 : i32
    %c0_i32_0 = arith.constant 0 : i32
    %c0_i32_1 = arith.constant 0 : i32
    return %c0_i32, %c0_i32_0 : i32, i32
  }
  func.func @transform_7(%arg0: i32) -> (i32, i32) {
    %c0_i32 = arith.constant 0 : i32
    %c0_i32_0 = arith.constant 0 : i32
    %c0_i32_1 = arith.constant 0 : i32
    return %c0_i32, %c0_i32_0 : i32, i32
  }
  func.func @transform_8(%arg0: i32) -> (i32, i32) {
    %c0_i32 = arith.constant 0 : i32
    %c0_i32_0 = arith.constant 0 : i32
    %c0_i32_1 = arith.constant 0 : i32
    return %c0_i32, %c0_i32_0 : i32, i32
  }
  func.func @transform_9(%arg0: i32) -> (i32, i32) {
    %c0_i32 = arith.constant 0 : i32
    %c0_i32_0 = arith.constant 0 : i32
    %c0_i32_1 = arith.constant 0 : i32
    return %c0_i32, %c0_i32_0 : i32, i32
  }
  func.func @transform_10(%arg0: i32) -> (i32, i32) {
    %c0_i32 = arith.constant 0 : i32
    %c0_i32_0 = arith.constant 0 : i32
    %c0_i32_1 = arith.constant 0 : i32
    return %c0_i32, %c0_i32_0 : i32, i32
  }
  func.func @transform_11(%arg0: i32) -> (i32, i32) {
    %c0_i32 = arith.constant 0 : i32
    %c0_i32_0 = arith.constant 0 : i32
    %c0_i32_1 = arith.constant 0 : i32
    return %c0_i32, %c0_i32_0 : i32, i32
  }
  func.func @transform_12(%arg0: i32) -> (i32, i32) {
    %c0_i32 = arith.constant 0 : i32
    %c0_i32_0 = arith.constant 0 : i32
    %c0_i32_1 = arith.constant 0 : i32
    return %c0_i32, %c0_i32_0 : i32, i32
  }
  func.func @transform_13(%arg0: i32) -> (i32, i32) {
    %c0_i32 = arith.constant 0 : i32
    %c0_i32_0 = arith.constant 0 : i32
    return %arg0, %c0_i32 : i32, i32
  }
  func.func @transform_14(%arg0: i32) -> (i32, i32) {
    %c0_i32 = arith.constant 0 : i32
    %c0_i32_0 = arith.constant 0 : i32
    return %arg0, %c0_i32 : i32, i32
  }
  func.func @transform_15(%arg0: i32) -> (i32, i32) {
    %c0_i32 = arith.constant 0 : i32
    %c0_i32_0 = arith.constant 0 : i32
    return %arg0, %c0_i32 : i32, i32
  }
  func.func @transform_16(%arg0: i32) -> (i32, i32) {
    %c0_i32 = arith.constant 0 : i32
    %c0_i32_0 = arith.constant 0 : i32
    return %arg0, %c0_i32 : i32, i32
  }
}

</mosaic_0001>

<llo_original>
// kernel: tpu_custom_call.1
$region0: #{tpu_custom_call.1}
  #allocation0 [shape = 'u32[]', space=smem, size = 0x4, offset = 0x4, fixed_abs, tag = 'smem constant byte address 0x4 - core index']
  #allocation1 [shape = 'u32[144,128]{1,0:T(1,128)}', space=vmem, size = 0x12000, scoped, tag = 'internal scratch']
  %s0 = inlined_call_operand.vmem [shape: bf16[8,64], index: 0, kind: input, shape index: {}]
  %s1 = inlined_call_operand.vmem [shape: bf16[64,32], index: 1, kind: input, shape index: {}]
  %s2 = inlined_call_operand.vmem [shape: f32[1,32], index: 2, kind: input, shape index: {}]
  %s3 = inlined_call_operand.vmem [shape: bf16[32,32], index: 3, kind: input, shape index: {}]
  %s4 = inlined_call_operand.vmem [shape: f32[1,32], index: 4, kind: input, shape index: {}]
  %s5 = inlined_call_operand.vmem [shape: bf16[32,256], index: 5, kind: input, shape index: {}]
  %s6 = inlined_call_operand.vmem [shape: f32[1,256], index: 6, kind: input, shape index: {}]
  %s7 = inlined_call_operand.vmem [shape: bf16[128,32], index: 7, kind: input, shape index: {}]
  %s8 = inlined_call_operand.vmem [shape: f32[1,32], index: 8, kind: input, shape index: {}]
  %s9 = inlined_call_operand.vmem [shape: bf16[32,32], index: 9, kind: input, shape index: {}]
  %s10 = inlined_call_operand.vmem [shape: f32[1,32], index: 10, kind: input, shape index: {}]
  %s11 = inlined_call_operand.vmem [shape: bf16[32,128], index: 11, kind: input, shape index: {}]
  %s12 = inlined_call_operand.vmem [shape: f32[1,128], index: 12, kind: input, shape index: {}]
  %s13 = inlined_call_operand.vmem [shape: f32[8,128], index: 13, kind: input, shape index: {}]
  %s14 = inlined_call_operand.hbm [shape: f32[8,128], index: 14, kind: output, shape index: {0}]
  %s15 = inlined_call_operand.hbm [shape: f32[8,256], index: 15, kind: output, shape index: {1}]
  %s16 = inlined_call_operand.hbm [shape: f32[8,128], index: 16, kind: output, shape index: {2}]
  %17 = xla_tuple %s14, %s15, %s16
  %s18 = sld [smem:[#allocation0]]
  $region82: #{tpu_custom_call.1} parent=0
    _
  %s20 = ssub.s32 1, %s18
  %s21 = scalar_select 0, %s20, %s18
  $region1: #{tpu_custom_call.1} parent=0
    #allocation2 [shape = 'u8[4096]{0}', space=vmem, size = 0x1000, scoped, tag = 'output window, operand 0, single buffered']
    #allocation3 [shape = 's32[1]{0}', space=sflag, size = 0x4, scoped, tag = 'scoped memory for tpu_custom_call.1']
    #allocation4 [shape = 'u8[8192]{0}', space=vmem, size = 0x2000, scoped, tag = 'output window, operand 1, single buffered']
    #allocation5 [shape = 's32[1]{0}', space=sflag, size = 0x4, scoped, tag = 'scoped memory for tpu_custom_call.1']
    #allocation6 [shape = 'u8[4096]{0}', space=vmem, size = 0x1000, scoped, tag = 'output window, operand 2, single buffered']
    %22 = vsyncpa [#allocation3], 0
    %23 = vsyncpa [#allocation5], 0
    // Predicated region
    $region2: #{tpu_custom_call.1} parent=1 // pred_check
      _
    $region3: #{tpu_custom_call.1} parent=1 // pred_check_branch
      %25 = sbr.rel (0) target = $region5
    $region4: #{tpu_custom_call.1} parent=1 // pred_region
      _
    $region5: #{tpu_custom_call.1} parent=1 // pred_fallthru
      _
    // Predicated region
    $region6: #{tpu_custom_call.1} parent=1 // pred_check
      _
    $region7: #{tpu_custom_call.1} parent=1 // pred_check_branch
      %27 = sbr.rel (0) target = $region9
    $region8: #{tpu_custom_call.1} parent=1 // pred_region
      _
    $region9: #{tpu_custom_call.1} parent=1 // pred_fallthru
      _
    // Predicated region
    $region10: #{tpu_custom_call.1} parent=1 // pred_check
      _
    $region11: #{tpu_custom_call.1} parent=1 // pred_check_branch
      %29 = sbr.rel (0) target = $region13
    $region12: #{tpu_custom_call.1} parent=1 // pred_region
      _
    $region13: #{tpu_custom_call.1} parent=1 // pred_fallthru
      _
    // Predicated region
    $region14: #{tpu_custom_call.1} parent=1 // pred_check
      _
    $region15: #{tpu_custom_call.1} parent=1 // pred_check_branch
      %31 = sbr.rel (0) target = $region17
    $region16: #{tpu_custom_call.1} parent=1 // pred_region
      _
    $region17: #{tpu_custom_call.1} parent=1 // pred_fallthru
      _
    // Predicated region
    $region18: #{tpu_custom_call.1} parent=1 // pred_check
      _
    $region19: #{tpu_custom_call.1} parent=1 // pred_check_branch
      %33 = sbr.rel (0) target = $region21
    $region20: #{tpu_custom_call.1} parent=1 // pred_region
      _
    $region21: #{tpu_custom_call.1} parent=1 // pred_fallthru
      _
    // Predicated region
    $region22: #{tpu_custom_call.1} parent=1 // pred_check
      _
    $region23: #{tpu_custom_call.1} parent=1 // pred_check_branch
      %35 = sbr.rel (0) target = $region25
    $region24: #{tpu_custom_call.1} parent=1 // pred_region
      _
    $region25: #{tpu_custom_call.1} parent=1 // pred_fallthru
      _
    // Predicated region
    $region26: #{tpu_custom_call.1} parent=1 // pred_check
      _
    $region27: #{tpu_custom_call.1} parent=1 // pred_check_branch
      %37 = sbr.rel (0) target = $region29
    $region28: #{tpu_custom_call.1} parent=1 // pred_region
      _
    $region29: #{tpu_custom_call.1} parent=1 // pred_fallthru
      _
    // Predicated region
    $region30: #{tpu_custom_call.1} parent=1 // pred_check
      _
    $region31: #{tpu_custom_call.1} parent=1 // pred_check_branch
      %39 = sbr.rel (0) target = $region33
    $region32: #{tpu_custom_call.1} parent=1 // pred_region
      _
    $region33: #{tpu_custom_call.1} parent=1 // pred_fallthru
      _
    // Predicated region
    $region34: #{tpu_custom_call.1} parent=1 // pred_check
      _
    $region35: #{tpu_custom_call.1} parent=1 // pred_check_branch
      %41 = sbr.rel (0) target = $region37
    $region36: #{tpu_custom_call.1} parent=1 // pred_region
      _
    $region37: #{tpu_custom_call.1} parent=1 // pred_fallthru
      _
    // Predicated region
    $region38: #{tpu_custom_call.1} parent=1 // pred_check
      _
    $region39: #{tpu_custom_call.1} parent=1 // pred_check_branch
      %43 = sbr.rel (0) target = $region41
    $region40: #{tpu_custom_call.1} parent=1 // pred_region
      _
    $region41: #{tpu_custom_call.1} parent=1 // pred_fallthru
      _
    // Predicated region
    $region42: #{tpu_custom_call.1} parent=1 // pred_check
      _
    $region43: #{tpu_custom_call.1} parent=1 // pred_check_branch
      %45 = sbr.rel (0) target = $region45
    $region44: #{tpu_custom_call.1} parent=1 // pred_region
      _
    $region45: #{tpu_custom_call.1} parent=1 // pred_fallthru
      _
    // Predicated region
    $region46: #{tpu_custom_call.1} parent=1 // pred_check
      _
    $region47: #{tpu_custom_call.1} parent=1 // pred_check_branch
      %47 = sbr.rel (0) target = $region49
    $region48: #{tpu_custom_call.1} parent=1 // pred_region
      _
    $region49: #{tpu_custom_call.1} parent=1 // pred_fallthru
      _
    // Predicated region
    $region50: #{tpu_custom_call.1} parent=1 // pred_check
      _
    $region51: #{tpu_custom_call.1} parent=1 // pred_check_branch
      %49 = sbr.rel (0) target = $region53
    $region52: #{tpu_custom_call.1} parent=1 // pred_region
      _
    $region53: #{tpu_custom_call.1} parent=1 // pred_fallthru
      _
    // Predicated region
    $region54: #{tpu_custom_call.1} parent=1 // pred_check
      _
    $region55: #{tpu_custom_call.1} parent=1 // pred_check_branch
      %51 = sbr.rel (0) target = $region57
    $region56: #{tpu_custom_call.1} parent=1 // pred_region
      _
    $region57: #{tpu_custom_call.1} parent=1 // pred_fallthru
      _
    %v53 = vld [vmem:[%s0] sm:$0xf]
    %v54 = vld [vmem:[%s1] sm:$0xf]
    %v55 = vld [vmem:[%s1 + $0x4] sm:$0xf]
    %v56 = vld [vmem:[%s1 + $0x8] sm:$0xf]
    %v57 = vld [vmem:[%s1 + $0xc] sm:$0xf]
    %v58 = vld [vmem:[%s1 + $0x10] sm:$0xf]
    %v59 = vld [vmem:[%s1 + $0x14] sm:$0xf]
    %v60 = vld [vmem:[%s1 + $0x18] sm:$0xf]
    %v61 = vld [vmem:[%s1 + $0x1c] sm:$0xf]
    %v62 = vld [vmem:[%s2] sm:$0x1]
    %v64 = vlaneseq
    %v65 = vshrl.u32 %v64, 7
    %v66 = vsub.s32 0, %v65
    %v67 = vrot.slane %v62, %v66
    %v77 = vunpack.c.l.b16 %v54
    %v78 = vunpack.c.l.b16 %v55
    %v79 = vunpack.c.l.b16 %v56
    %v80 = vunpack.c.l.b16 %v57
    %v81 = vunpack.c.l.b16 %v58
    %v82 = vunpack.c.l.b16 %v59
    %v83 = vunpack.c.l.b16 %v60
    %v84 = vunpack.c.l.b16 %v61
    %v85 = vpack.c.b16 %v78, %v77
    %v86 = vpack.c.b16 %v80, %v79
    %v87 = vpack.c.b16 %v82, %v81
    %v88 = vpack.c.b16 %v84, %v83
    %vm93 = vcmask 523264
    %v95 = vsel %vm93, %v53, 0
    %97 = vmatprep.subr.bf16.mxu0 0
    %98 = vmatpush1.bf16.msra.mxu0 %v85
    %99 = vmatprep.subr.bf16.mxu0 0
    %100 = vmatpush1.bf16.msra.mxu0 %v86
    %101 = vmatprep.subr.bf16.mxu0 0
    %102 = vmatpush1.bf16.msra.mxu0 %v87
    %103 = vmatprep.subr.bf16.mxu0 0
    %104 = vmatpush1.bf16.msra.mxu0 %v88
    %105 = vmatprep.subr.bf16.mxu0 0
    %106 = vmatpush1.bf16.msra.mxu0 0
    %107 = vmatprep.subr.bf16.mxu0 0
    %108 = vmatpush1.bf16.msra.mxu0 0
    %109 = vmatprep.subr.bf16.mxu0 0
    %110 = vmatpush1.bf16.msra.mxu0 0
    %111 = vmatprep.subr.bf16.mxu0 0
    %112 = vmatpush1.bf16.msra.mxu0 0
    %113 = vmatprep.subr.bf16.mxu0 0
    %114 = vmatpush1.bf16.msra.mxu0 0
    %115 = vmatprep.subr.bf16.mxu0 0
    %116 = vmatpush1.bf16.msra.mxu0 0
    %117 = vmatprep.subr.bf16.mxu0 0
    %118 = vmatpush1.bf16.msra.mxu0 0
    %119 = vmatprep.subr.bf16.mxu0 0
    %120 = vmatpush1.bf16.msra.mxu0 0
    %121 = vmatprep.subr.bf16.mxu0 0
    %122 = vmatpush1.bf16.msra.mxu0 0
    %123 = vmatprep.subr.bf16.mxu0 0
    %124 = vmatpush1.bf16.msra.mxu0 0
    %125 = vmatprep.subr.bf16.mxu0 0
    %126 = vmatpush1.bf16.msra.mxu0 0
    %127 = vmatprep.subr.bf16.mxu0 0
    %128 = vmatpush1.bf16.msra.mxu0 0
    %129 = vmatprep.mubr.bf16.mxu0 0
    %130 = vmatmul.mubr.bf16.gmra.mrb[0].mxu0 %v95
    %v131 = vpop.f32.mrb[0].mxu0
    %v132 = vadd.f32 %v67, %v131
    %v133 = vpop.f32.mrb[0].mxu0
    %v134 = vpop.f32.mrb[0].mxu0
    %v135 = vpop.f32.mrb[0].mxu0
    %136 = vdwg.mxu0
    %v137 = vmax.f32 %v132, 0.0
    %v138 = vpack.c.bf16 %v137, %v137
    %v139 = vld [vmem:[%s3] sm:$0xf]
    %v140 = vld [vmem:[%s3 + $0x4] sm:$0xf]
    %v141 = vld [vmem:[%s3 + $0x8] sm:$0xf]
    %v142 = vld [vmem:[%s3 + $0xc] sm:$0xf]
    %v143 = vld [vmem:[%s4] sm:$0x1]
    %v145 = vlaneseq
    %v146 = vshrl.u32 %v145, 7
    %v147 = vsub.s32 0, %v146
    %v148 = vrot.slane %v143, %v147
    %v154 = vunpack.c.l.b16 %v139
    %v155 = vunpack.c.l.b16 %v140
    %v156 = vunpack.c.l.b16 %v141
    %v157 = vunpack.c.l.b16 %v142
    %v158 = vpack.c.b16 %v155, %v154
    %v159 = vpack.c.b16 %v157, %v156
    %vm162 = vcmask 261120
    %v164 = vsel %vm162, %v138, 0
    %166 = vmatprep.subr.bf16.mxu0 0
    %167 = vmatpush1.bf16.msra.mxu0 %v158
    %168 = vmatprep.subr.bf16.mxu0 0
    %169 = vmatpush1.bf16.msra.mxu0 %v159
    %170 = vmatprep.subr.bf16.mxu0 0
    %171 = vmatpush1.bf16.msra.mxu0 0
    %172 = vmatprep.subr.bf16.mxu0 0
    %173 = vmatpush1.bf16.msra.mxu0 0
    %174 = vmatprep.subr.bf16.mxu0 0
    %175 = vmatpush1.bf16.msra.mxu0 0
    %176 = vmatprep.subr.bf16.mxu0 0
    %177 = vmatpush1.bf16.msra.mxu0 0
    %178 = vmatprep.subr.bf16.mxu0 0
    %179 = vmatpush1.bf16.msra.mxu0 0
    %180 = vmatprep.subr.bf16.mxu0 0
    %181 = vmatpush1.bf16.msra.mxu0 0
    %182 = vmatprep.subr.bf16.mxu0 0
    %183 = vmatpush1.bf16.msra.mxu0 0
    %184 = vmatprep.subr.bf16.mxu0 0
    %185 = vmatpush1.bf16.msra.mxu0 0
    %186 = vmatprep.subr.bf16.mxu0 0
    %187 = vmatpush1.bf16.msra.mxu0 0
    %188 = vmatprep.subr.bf16.mxu0 0
    %189 = vmatpush1.bf16.msra.mxu0 0
    %190 = vmatprep.subr.bf16.mxu0 0
    %191 = vmatpush1.bf16.msra.mxu0 0
    %192 = vmatprep.subr.bf16.mxu0 0
    %193 = vmatpush1.bf16.msra.mxu0 0
    %194 = vmatprep.subr.bf16.mxu0 0
    %195 = vmatpush1.bf16.msra.mxu0 0
    %196 = vmatprep.subr.bf16.mxu0 0
    %197 = vmatpush1.bf16.msra.mxu0 0
    %198 = vmatprep.mubr.bf16.mxu0 0
    %199 = vmatmul.mubr.bf16.gmra.mrb[0].mxu0 %v164
    %v200 = vpop.f32.mrb[0].mxu0
    %v201 = vadd.f32 %v148, %v200
    %v202 = vpop.f32.mrb[0].mxu0
    %v203 = vpop.f32.mrb[0].mxu0
    %v204 = vpop.f32.mrb[0].mxu0
    %205 = vdwg.mxu0
    %v206 = vmax.f32 %v201, 0.0
    %v207 = vpack.c.bf16 %v206, %v206
    %v208 = vld [vmem:[%s5] sm:$0xff]
    %v209 = vld [vmem:[%s5 + $0x8] sm:$0xff]
    %v210 = vld [vmem:[%s5 + $0x10] sm:$0xff]
    %v211 = vld [vmem:[%s5 + $0x18] sm:$0xff]
    %v212 = vld [vmem:[%s6] sm:$0x3]
    %v214 = vlaneseq
    %v215 = vshrl.u32 %v214, 7
    %v216 = vsub.s32 0, %v215
    %v217 = vrot.slane %v212, %v216
    %v218 = vlaneseq
    %v219 = vshrl.u32 %v218, 7
    %v220 = vsub.s32 1, %v219
    %v221 = vrot.slane %v212, %v220
    %v228 = vunpack.c.l.b16 %v208
    %v229 = vunpack.c.h.b16 %v208
    %v230 = vunpack.c.l.b16 %v209
    %v231 = vunpack.c.h.b16 %v209
    %v232 = vunpack.c.l.b16 %v210
    %v233 = vunpack.c.h.b16 %v210
    %v234 = vunpack.c.l.b16 %v211
    %v235 = vunpack.c.h.b16 %v211
    %v236 = vpack.c.b16 %v230, %v228
    %v237 = vpack.c.b16 %v231, %v229
    %v238 = vpack.c.b16 %v234, %v232
    %v239 = vpack.c.b16 %v235, %v233
    %v245 = vsel %vm162, %v207, 0
    %247 = vmatprep.subr.bf16.mxu0 %v237
    %248 = vmatpush1.bf16.msra.mxu0 %v236
    %249 = vmatprep.subr.bf16.mxu0 %v239
    %250 = vmatpush1.bf16.msra.mxu0 %v238
    %251 = vmatprep.subr.bf16.mxu0 0
    %252 = vmatpush1.bf16.msra.mxu0 0
    %253 = vmatprep.subr.bf16.mxu0 0
    %254 = vmatpush1.bf16.msra.mxu0 0
    %255 = vmatprep.subr.bf16.mxu0 0
    %256 = vmatpush1.bf16.msra.mxu0 0
    %257 = vmatprep.subr.bf16.mxu0 0
    %258 = vmatpush1.bf16.msra.mxu0 0
    %259 = vmatprep.subr.bf16.mxu0 0
    %260 = vmatpush1.bf16.msra.mxu0 0
    %261 = vmatprep.subr.bf16.mxu0 0
    %262 = vmatpush1.bf16.msra.mxu0 0
    %263 = vmatprep.subr.bf16.mxu0 0
    %264 = vmatpush1.bf16.msra.mxu0 0
    %265 = vmatprep.subr.bf16.mxu0 0
    %266 = vmatpush1.bf16.msra.mxu0 0
    %267 = vmatprep.subr.bf16.mxu0 0
    %268 = vmatpush1.bf16.msra.mxu0 0
    %269 = vmatprep.subr.bf16.mxu0 0
    %270 = vmatpush1.bf16.msra.mxu0 0
    %271 = vmatprep.subr.bf16.mxu0 0
    %272 = vmatpush1.bf16.msra.mxu0 0
    %273 = vmatprep.subr.bf16.mxu0 0
    %274 = vmatpush1.bf16.msra.mxu0 0
    %275 = vmatprep.subr.bf16.mxu0 0
    %276 = vmatpush1.bf16.msra.mxu0 0
    %277 = vmatprep.subr.bf16.mxu0 0
    %278 = vmatpush1.bf16.msra.mxu0 0
    %279 = vmatprep.mubr.bf16.mxu0 0
    %280 = vmatmul.mubr.bf16.gmra.mrb[0].mxu0 %v245
    %v281 = vpop.f32.mrb[0].mxu0
    %v282 = vadd.f32 %v217, %v281
    %v283 = vpop.f32.mrb[0].mxu0
    %v284 = vadd.f32 %v221, %v283
    %v285 = vpop.f32.mrb[0].mxu0
    %v286 = vpop.f32.mrb[0].mxu0
    %287 = vdwg.mxu0
    %v288 = vmul.f32 %v284, 0.5
    %v289 = vmul.f32 %v288, 1.442695
    %v290 = vpow.pop %v289
    %v291 = vld [vmem:[%s13] sm:$0xff]
    %v292 = vmul.f32 %v291, %v290
    %v293 = vadd.f32 %v292, %v282
    %v294 = vpack.c.bf16 %v293, %v293
    %v295 = vld [vmem:[%s7] sm:$0xf]
    %v296 = vld [vmem:[%s7 + $0x4] sm:$0xf]
    %v297 = vld [vmem:[%s7 + $0x8] sm:$0xf]
    %v298 = vld [vmem:[%s7 + $0xc] sm:$0xf]
    %v299 = vld [vmem:[%s7 + $0x10] sm:$0xf]
    %v300 = vld [vmem:[%s7 + $0x14] sm:$0xf]
    %v301 = vld [vmem:[%s7 + $0x18] sm:$0xf]
    %v302 = vld [vmem:[%s7 + $0x1c] sm:$0xf]
    %v303 = vld [vmem:[%s7 + $0x20] sm:$0xf]
    %v304 = vld [vmem:[%s7 + $0x24] sm:$0xf]
    %v305 = vld [vmem:[%s7 + $0x28] sm:$0xf]
    %v306 = vld [vmem:[%s7 + $0x2c] sm:$0xf]
    %v307 = vld [vmem:[%s7 + $0x30] sm:$0xf]
    %v308 = vld [vmem:[%s7 + $0x34] sm:$0xf]
    %v309 = vld [vmem:[%s7 + $0x38] sm:$0xf]
    %v310 = vld [vmem:[%s7 + $0x3c] sm:$0xf]
    %v311 = vld [vmem:[%s8] sm:$0x1]
    %v313 = vlaneseq
    %v314 = vshrl.u32 %v313, 7
    %v315 = vsub.s32 0, %v314
    %v316 = vrot.slane %v311, %v315
    %v334 = vunpack.c.l.b16 %v295
    %v335 = vunpack.c.l.b16 %v296
    %v336 = vunpack.c.l.b16 %v297
    %v337 = vunpack.c.l.b16 %v298
    %v338 = vunpack.c.l.b16 %v299
    %v339 = vunpack.c.l.b16 %v300
    %v340 = vunpack.c.l.b16 %v301
    %v341 = vunpack.c.l.b16 %v302
    %v342 = vunpack.c.l.b16 %v303
    %v343 = vunpack.c.l.b16 %v304
    %v344 = vunpack.c.l.b16 %v305
    %v345 = vunpack.c.l.b16 %v306
    %v346 = vunpack.c.l.b16 %v307
    %v347 = vunpack.c.l.b16 %v308
    %v348 = vunpack.c.l.b16 %v309
    %v349 = vunpack.c.l.b16 %v310
    %v350 = vpack.c.b16 %v335, %v334
    %v351 = vpack.c.b16 %v337, %v336
    %v352 = vpack.c.b16 %v339, %v338
    %v353 = vpack.c.b16 %v341, %v340
    %v354 = vpack.c.b16 %v343, %v342
    %v355 = vpack.c.b16 %v345, %v344
    %v356 = vpack.c.b16 %v347, %v346
    %v357 = vpack.c.b16 %v349, %v348
    %366 = vmatprep.subr.bf16.mxu0 0
    %367 = vmatpush1.bf16.msra.mxu0 %v350
    %368 = vmatprep.subr.bf16.mxu0 0
    %369 = vmatpush1.bf16.msra.mxu0 %v351
    %370 = vmatprep.subr.bf16.mxu0 0
    %371 = vmatpush1.bf16.msra.mxu0 %v352
    %372 = vmatprep.subr.bf16.mxu0 0
    %373 = vmatpush1.bf16.msra.mxu0 %v353
    %374 = vmatprep.subr.bf16.mxu0 0
    %375 = vmatpush1.bf16.msra.mxu0 %v354
    %376 = vmatprep.subr.bf16.mxu0 0
    %377 = vmatpush1.bf16.msra.mxu0 %v355
    %378 = vmatprep.subr.bf16.mxu0 0
    %379 = vmatpush1.bf16.msra.mxu0 %v356
    %380 = vmatprep.subr.bf16.mxu0 0
    %381 = vmatpush1.bf16.msra.mxu0 %v357
    %382 = vmatprep.subr.bf16.mxu0 0
    %383 = vmatpush1.bf16.msra.mxu0 0
    %384 = vmatprep.subr.bf16.mxu0 0
    %385 = vmatpush1.bf16.msra.mxu0 0
    %386 = vmatprep.subr.bf16.mxu0 0
    %387 = vmatpush1.bf16.msra.mxu0 0
    %388 = vmatprep.subr.bf16.mxu0 0
    %389 = vmatpush1.bf16.msra.mxu0 0
    %390 = vmatprep.subr.bf16.mxu0 0
    %391 = vmatpush1.bf16.msra.mxu0 0
    %392 = vmatprep.subr.bf16.mxu0 0
    %393 = vmatpush1.bf16.msra.mxu0 0
    %394 = vmatprep.subr.bf16.mxu0 0
    %395 = vmatpush1.bf16.msra.mxu0 0
    %396 = vmatprep.subr.bf16.mxu0 0
    %397 = vmatpush1.bf16.msra.mxu0 0
    %398 = vmatprep.mubr.bf16.mxu0 0
    %399 = vmatmul.mubr.bf16.gmra.mrb[0].mxu0 %v294
    %v400 = vpop.f32.mrb[0].mxu0
    %v401 = vadd.f32 %v316, %v400
    %v402 = vpop.f32.mrb[0].mxu0
    %v403 = vpop.f32.mrb[0].mxu0
    %v404 = vpop.f32.mrb[0].mxu0
    %405 = vdwg.mxu0
    %v406 = vmax.f32 %v401, 0.0
    %v407 = vpack.c.bf16 %v406, %v406
    %v408 = vld [vmem:[%s9] sm:$0xf]
    %v409 = vld [vmem:[%s9 + $0x4] sm:$0xf]
    %v410 = vld [vmem:[%s9 + $0x8] sm:$0xf]
    %v411 = vld [vmem:[%s9 + $0xc] sm:$0xf]
    %v412 = vld [vmem:[%s10] sm:$0x1]
    %v414 = vlaneseq
    %v415 = vshrl.u32 %v414, 7
    %v416 = vsub.s32 0, %v415
    %v417 = vrot.slane %v412, %v416
    %v423 = vunpack.c.l.b16 %v408
    %v424 = vunpack.c.l.b16 %v409
    %v425 = vunpack.c.l.b16 %v410
    %v426 = vunpack.c.l.b16 %v411
    %v427 = vpack.c.b16 %v424, %v423
    %v428 = vpack.c.b16 %v426, %v425
    %v432 = vsel %vm162, %v407, 0
    %434 = vmatprep.subr.bf16.mxu0 0
    %435 = vmatpush1.bf16.msra.mxu0 %v427
    %436 = vmatprep.subr.bf16.mxu0 0
    %437 = vmatpush1.bf16.msra.mxu0 %v428
    %438 = vmatprep.subr.bf16.mxu0 0
    %439 = vmatpush1.bf16.msra.mxu0 0
    %440 = vmatprep.subr.bf16.mxu0 0
    %441 = vmatpush1.bf16.msra.mxu0 0
    %442 = vmatprep.subr.bf16.mxu0 0
    %443 = vmatpush1.bf16.msra.mxu0 0
    %444 = vmatprep.subr.bf16.mxu0 0
    %445 = vmatpush1.bf16.msra.mxu0 0
    %446 = vmatprep.subr.bf16.mxu0 0
    %447 = vmatpush1.bf16.msra.mxu0 0
    %448 = vmatprep.subr.bf16.mxu0 0
    %449 = vmatpush1.bf16.msra.mxu0 0
    %450 = vmatprep.subr.bf16.mxu0 0
    %451 = vmatpush1.bf16.msra.mxu0 0
    %452 = vmatprep.subr.bf16.mxu0 0
    %453 = vmatpush1.bf16.msra.mxu0 0
    %454 = vmatprep.subr.bf16.mxu0 0
    %455 = vmatpush1.bf16.msra.mxu0 0
    %456 = vmatprep.subr.bf16.mxu0 0
    %457 = vmatpush1.bf16.msra.mxu0 0
    %458 = vmatprep.subr.bf16.mxu0 0
    %459 = vmatpush1.bf16.msra.mxu0 0
    %460 = vmatprep.subr.bf16.mxu0 0
    %461 = vmatpush1.bf16.msra.mxu0 0
    %462 = vmatprep.subr.bf16.mxu0 0
    %463 = vmatpush1.bf16.msra.mxu0 0
    %464 = vmatprep.subr.bf16.mxu0 0
    %465 = vmatpush1.bf16.msra.mxu0 0
    %466 = vmatprep.mubr.bf16.mxu0 0
    %467 = vmatmul.mubr.bf16.gmra.mrb[0].mxu0 %v432
    %v468 = vpop.f32.mrb[0].mxu0
    %v469 = vadd.f32 %v417, %v468
    %v470 = vpop.f32.mrb[0].mxu0
    %v471 = vpop.f32.mrb[0].mxu0
    %v472 = vpop.f32.mrb[0].mxu0
    %473 = vdwg.mxu0
    %v474 = vmax.f32 %v469, 0.0
    %v475 = vpack.c.bf16 %v474, %v474
    %v476 = vld [vmem:[%s11] sm:$0xf]
    %v477 = vld [vmem:[%s11 + $0x4] sm:$0xf]
    %v478 = vld [vmem:[%s11 + $0x8] sm:$0xf]
    %v479 = vld [vmem:[%s11 + $0xc] sm:$0xf]
    %v480 = vld [vmem:[%s12] sm:$0x1]
    %v482 = vlaneseq
    %v483 = vshrl.u32 %v482, 7
    %v484 = vsub.s32 0, %v483
    %v485 = vrot.slane %v480, %v484
    %v491 = vunpack.c.l.b16 %v476
    %v492 = vunpack.c.l.b16 %v477
    %v493 = vunpack.c.l.b16 %v478
    %v494 = vunpack.c.l.b16 %v479
    %v495 = vpack.c.b16 %v492, %v491
    %v496 = vpack.c.b16 %v494, %v493
    %v500 = vsel %vm162, %v475, 0
    %502 = vmatprep.subr.bf16.mxu0 0
    %503 = vmatpush1.bf16.msra.mxu0 %v495
    %504 = vmatprep.subr.bf16.mxu0 0
    %505 = vmatpush1.bf16.msra.mxu0 %v496
    %506 = vmatprep.subr.bf16.mxu0 0
    %507 = vmatpush1.bf16.msra.mxu0 0
    %508 = vmatprep.subr.bf16.mxu0 0
    %509 = vmatpush1.bf16.msra.mxu0 0
    %510 = vmatprep.subr.bf16.mxu0 0
    %511 = vmatpush1.bf16.msra.mxu0 0
    %512 = vmatprep.subr.bf16.mxu0 0
    %513 = vmatpush1.bf16.msra.mxu0 0
    %514 = vmatprep.subr.bf16.mxu0 0
    %515 = vmatpush1.bf16.msra.mxu0 0
    %516 = vmatprep.subr.bf16.mxu0 0
    %517 = vmatpush1.bf16.msra.mxu0 0
    %518 = vmatprep.subr.bf16.mxu0 0
    %519 = vmatpush1.bf16.msra.mxu0 0
    %520 = vmatprep.subr.bf16.mxu0 0
    %521 = vmatpush1.bf16.msra.mxu0 0
    %522 = vmatprep.subr.bf16.mxu0 0
    %523 = vmatpush1.bf16.msra.mxu0 0
    %524 = vmatprep.subr.bf16.mxu0 0
    %525 = vmatpush1.bf16.msra.mxu0 0
    %526 = vmatprep.subr.bf16.mxu0 0
    %527 = vmatpush1.bf16.msra.mxu0 0
    %528 = vmatprep.subr.bf16.mxu0 0
    %529 = vmatpush1.bf16.msra.mxu0 0
    %530 = vmatprep.subr.bf16.mxu0 0
    %531 = vmatpush1.bf16.msra.mxu0 0
    %532 = vmatprep.subr.bf16.mxu0 0
    %533 = vmatpush1.bf16.msra.mxu0 0
    %534 = vmatprep.mubr.bf16.mxu0 0
    %535 = vmatmul.mubr.bf16.gmra.mrb[0].mxu0 %v500
    %v536 = vpop.f32.mrb[0].mxu0
    %v537 = vadd.f32 %v485, %v536
    %v538 = vpop.f32.mrb[0].mxu0
    %v539 = vpop.f32.mrb[0].mxu0
    %v540 = vpop.f32.mrb[0].mxu0
    %541 = vdwg.mxu0
    %v542 = vsub.f32 0.0, %v537
    %v543 = vmul.f32 %v542, 1.442695
    %v544 = vpow.pop %v543
    %v545 = vadd.f32 %v544, 1.0
    %v546 = vrcp.pop %v545
    %v547 = vmul.f32 1.0, %v546
    %548 = vst [vmem:[#allocation2] sm:$0xff] %v547
    %549 = vst [vmem:[#allocation4] sm:$0xff] %v282
    %550 = vst [vmem:[#allocation4 + $0x8] sm:$0xff] %v284
    %551 = vst [vmem:[#allocation6] sm:$0xff] %v293
    // Predicated region
    $region58: #{tpu_custom_call.1} parent=1 // pred_check
      _
    $region59: #{tpu_custom_call.1} parent=1 // pred_check_branch
      %553 = sbr.rel (0) target = $region61
    $region60: #{tpu_custom_call.1} parent=1 // pred_region
      %s555 = ssub.s32 128, 128
      %556 = vsyncadd [#allocation3], %s555
      %s558 = sshll.u32 [#allocation2], 4
      %s559 = int_to_ptr.vmem [resolvable:$true] %s558
      %561 = dma.vmem_to_hbm [thread:$0]  %s559, 128, %s14, [#allocation3]
    $region61: #{tpu_custom_call.1} parent=1 // pred_fallthru
      _
    // Predicated region
    $region62: #{tpu_custom_call.1} parent=1 // pred_check
      _
    $region63: #{tpu_custom_call.1} parent=1 // pred_check_branch
      %563 = sbr.rel (0) target = $region65
    $region64: #{tpu_custom_call.1} parent=1 // pred_region
      %s565 = ssub.s32 256, 256
      %566 = vsyncadd [#allocation5], %s565
      %s568 = sshll.u32 [#allocation4], 4
      %s569 = int_to_ptr.vmem [resolvable:$true] %s568
      %571 = dma.vmem_to_hbm [thread:$0]  %s569, 256, %s15, [#allocation5]
    $region65: #{tpu_custom_call.1} parent=1 // pred_fallthru
      _
    // Predicated region
    $region66: #{tpu_custom_call.1} parent=1 // pred_check
      _
    $region67: #{tpu_custom_call.1} parent=1 // pred_check_branch
      %573 = sbr.rel (0) target = $region69
    $region68: #{tpu_custom_call.1} parent=1 // pred_region
      %s575 = ssub.s32 128, 128
      %576 = vsyncadd [#allocation5], %s575
      %s578 = sshll.u32 [#allocation6], 4
      %s579 = int_to_ptr.vmem [resolvable:$true] %s578
      %581 = dma.vmem_to_hbm [thread:$0]  %s579, 128, %s16, [#allocation5]
    $region69: #{tpu_custom_call.1} parent=1 // pred_fallthru
      _
    // Predicated region
    $region70: #{tpu_custom_call.1} parent=1 // pred_check
      _
    $region71: #{tpu_custom_call.1} parent=1 // pred_check_branch
      %583 = sbr.rel (0) target = $region73
    $region72: #{tpu_custom_call.1} parent=1 // pred_region
      %584 = dma.done [#allocation3], 128
    $region73: #{tpu_custom_call.1} parent=1 // pred_fallthru
      _
    // Predicated region
    $region74: #{tpu_custom_call.1} parent=1 // pred_check
      _
    $region75: #{tpu_custom_call.1} parent=1 // pred_check_branch
      %586 = sbr.rel (0) target = $region77
    $region76: #{tpu_custom_call.1} parent=1 // pred_region
      %587 = dma.done [#allocation5], 256
    $region77: #{tpu_custom_call.1} parent=1 // pred_fallthru
      _
    // Predicated region
    $region78: #{tpu_custom_call.1} parent=1 // pred_check
      _
    $region79: #{tpu_custom_call.1} parent=1 // pred_check_branch
      %589 = sbr.rel (0) target = $region81
    $region80: #{tpu_custom_call.1} parent=1 // pred_region
      %590 = dma.done [#allocation5], 128
    $region81: #{tpu_custom_call.1} parent=1 // pred_fallthru
      _
    %591 = vsyncpa [#allocation3], 1
    %592 = vsyncpa [#allocation5], 1

</llo_original>
